<compile_context>
chip_gen: v7x
topology: tpu7x:2x2x1
jax: 0.10.0
libtpu: 0.0.40
codegen_flags: <defaults>
</compile_context>

<pallas_src>
import functools

import jax
import jax.numpy as jnp
from jax.experimental import pallas as pl
from jax.experimental.pallas import tpu as pltpu

EPS = 1e-10


def _seg_head_kernel(x_ref, w_ref, bg_ref, o_ref, *, compute_dtype):
    """Fused conv1x1 (as matmul) + bias + ReLU + channel-wise L2Norm * gamma.

    Shapes seen by the kernel (batch dim squeezed out by the BlockSpec):
      x_ref : (Cin, t_hw)   native dtype (f32/bf16); cast to bf16 here
      w_ref : (Cout, Cin)   bf16, VMEM-resident (constant index_map)
      bg_ref: (Cout, 2)     f32, [:,0] = conv bias, [:,1] = L2Norm gamma
      o_ref : (Cout, t_hw)  out dtype
    """
    x = x_ref[...].astype(compute_dtype)                       # in-kernel cast
    # Single MXU matmul per tile, f32 accumulation; spatial stays on lanes.
    y = jnp.dot(w_ref[...], x, preferred_element_type=jnp.float32)
    y = jnp.maximum(y + bg_ref[:, 0:1], 0.0)                    # bias + ReLU
    # L2 norm over the channel (sublane) axis, per spatial position.
    sumsq = jnp.sum(y * y, axis=0, keepdims=True)
    inv = jax.lax.rsqrt(sumsq + EPS * EPS)                      # one EUP op
    o_ref[...] = (y * inv * bg_ref[:, 1:2]).astype(o_ref.dtype)


def _round_up(x, m):
    return ((x + m - 1) // m) * m


@functools.partial(jax.jit, static_argnames=("t_hw", "compute_dtype", "out_dtype"))
def seg_head(x_nchw, conv_w, conv_b, l2_w, *, t_hw=512,
             compute_dtype=jnp.bfloat16, out_dtype=None):
    """conv6(1x1) + ReLU + L2Norm(scale) head.

    x_nchw: (N, Cin, H, W); conv_w: (Cout, Cin) or (Cout, Cin, 1, 1);
    conv_b: (Cout,); l2_w: (Cout,).

    t_hw: spatial tile (lanes). 512 is a safe default on all generations with
    f32 activations streamed in; v5e/v6e (128 MiB VMEM) can go 1024+.
    """
    N, Cin, H, W = x_nchw.shape
    conv_w = conv_w.reshape(conv_w.shape[0], -1)          # (Cout,Cin[,1,1]) -> (Cout,Cin)
    Cout = conv_w.shape[0]
    HW = H * W
    out_dtype = x_nchw.dtype if out_dtype is None else out_dtype

    # Spatial tile: multiple of 128 lanes, clamped to the lane-rounded map size.
    t = _round_up(min(t_hw, _round_up(HW, 128)), 128)
    n_hw = pl.cdiv(HW, t)

    # NCHW -> (N, Cin, HW) is a free view (channels on sublanes, spatial on
    # lanes). No pad, no dtype cast here: the ragged tail (if HW % t != 0) is
    # masked by Pallas at the block boundary, and the bf16 cast happens in-tile.
    x = x_nchw.reshape(N, Cin, HW)
    w = conv_w.astype(compute_dtype)                       # tiny, cast once
    bg = jnp.stack([conv_b.astype(jnp.float32),
                    l2_w.astype(jnp.float32)], axis=1)     # (Cout, 2)

    kernel = functools.partial(_seg_head_kernel, compute_dtype=compute_dtype)

    out = pl.pallas_call(
        kernel,
        out_shape=jax.ShapeDtypeStruct((N, Cout, HW), out_dtype),
        grid_spec=pltpu.PrefetchScalarGridSpec(
            num_scalar_prefetch=0,
            grid=(N, n_hw),
            in_specs=[
                # activations: one batch element, full Cin, one spatial tile
                pl.BlockSpec((None, Cin, t), lambda n, j: (n, 0, j)),
                # full weight matrix, constant index -> fetched once, VMEM-resident
                pl.BlockSpec((Cout, Cin), lambda n, j: (0, 0)),
                # packed [bias, gamma]
                pl.BlockSpec((Cout, 2), lambda n, j: (0, 0)),
            ],
            out_specs=pl.BlockSpec((None, Cout, t), lambda n, j: (n, 0, j)),
        ),
        compiler_params=pltpu.CompilerParams(
            dimension_semantics=("parallel", "parallel"),
            # <= ~48 MiB keeps double-buffering safe on v7x (64 MiB physical);
            # plenty of headroom on v5e/v6e (128 MiB physical).
            vmem_limit_bytes=48 * 1024 * 1024,
        ),
    )(x, w, bg)

    return out.reshape(N, Cout, H, W)


def _reference(x_nchw, conv_w, conv_b, l2_w, compute_dtype=jnp.bfloat16):
    """Pure-JAX reference (conv1x1 + ReLU + L2Norm) at matching operand precision."""
    conv_w = conv_w.reshape(conv_w.shape[0], -1)
    y = jnp.einsum("nchw,oc->nohw",
                   x_nchw.astype(compute_dtype), conv_w.astype(compute_dtype),
                   preferred_element_type=jnp.float32)
    y = jnp.maximum(y + conv_b[None, :, None, None], 0.0)
    norm = jnp.sqrt(jnp.sum(y * y, axis=1, keepdims=True)) + EPS
    return y / norm * l2_w[None, :, None, None]


if __name__ == "__main__":
    # Small stand-in shapes (module uses Cin=2048, Cout=512 at full size).
    N, Cin, H, W = 2, 256, 16, 16
    Cout = 128
    L2_SCALE = 400.0

    key = jax.random.PRNGKey(0)
    kx, kw, kb = jax.random.split(key, 3)

    x = jax.random.normal(kx, (N, Cin, H, W), dtype=jnp.float32)
    conv_w = jax.random.normal(kw, (Cout, Cin), dtype=jnp.float32) * 0.02
    conv_b = jax.random.normal(kb, (Cout,), dtype=jnp.float32) * 0.01
    l2_w = jnp.full((Cout,), L2_SCALE, dtype=jnp.float32)   # L2Norm weight = scale

    out = seg_head(x, conv_w, conv_b, l2_w)
    jax.block_until_ready(out)

    ref = _reference(x, conv_w, conv_b, l2_w)
    assert out.shape == (N, Cout, H, W)
    assert out.dtype == x.dtype
    # Tolerance covers bf16-operand matmul reduction-order differences and the
    # rsqrt(sumsq + eps^2) vs (sqrt(sumsq) + eps) epsilon placement (negligible).
    assert jnp.allclose(out, ref, atol=1e-2, rtol=1e-2), \
        float(jnp.max(jnp.abs(out - ref)))

    print("KERNEL_OK")
</pallas_src>

<mosaic_0001>
module attributes {stable_mosaic.version = 11 : i64} {
  func.func @_seg_head_kernel(%arg0: i32, %arg1: i32, %arg2: memref<1x256x256xf32, #tpu.memory_space<vmem>>, %arg3: memref<128x256xbf16, #tpu.memory_space<vmem>>, %arg4: memref<128x2xf32, #tpu.memory_space<vmem>>, %arg5: memref<1x128x256xf32, #tpu.memory_space<vmem>>) attributes {dimension_semantics = [#tpu.dimension_semantics<parallel>, #tpu.dimension_semantics<parallel>], iteration_bounds = array<i64: 2, 1>, scalar_prefetch = 0 : i64, scratch_operands = 0 : i64, tpu.core_type = #tpu.core_type<tc>, window_params = [{transform_indices = @transform_0, window_bounds = array<i64: 1, 256, 256>}, {pipeline_mode = #tpu.pipeline_mode<synchronous>, transform_indices = @transform_1, window_bounds = array<i64: 128, 256>}, {pipeline_mode = #tpu.pipeline_mode<synchronous>, transform_indices = @transform_2, window_bounds = array<i64: 128, 2>}, {transform_indices = @transform_3, window_bounds = array<i64: 1, 128, 256>}]} {
    %c0 = arith.constant 0 : index
    %c0_0 = arith.constant 0 : index
    %c0_1 = arith.constant 0 : index
    %0 = vector.load %arg2[%c0, %c0_0, %c0_1] : memref<1x256x256xf32, #tpu.memory_space<vmem>>, vector<1x256x256xf32>
    %1 = vector.shape_cast %0 : vector<1x256x256xf32> to vector<256x256xf32>
    %2 = arith.truncf %1 : vector<256x256xf32> to vector<256x256xbf16>
    %c0_2 = arith.constant 0 : index
    %c0_3 = arith.constant 0 : index
    %3 = vector.load %arg3[%c0_2, %c0_3] : memref<128x256xbf16, #tpu.memory_space<vmem>>, vector<128x256xbf16>
    %cst = arith.constant dense<0.000000e+00> : vector<128x256xf32>
    %4 = tpu.matmul %3, %2, %cst {dimension_numbers = #tpu.dot_dimension_numbers<[1], [0], [0], [1], [0, 0, 1, 1], [], []>} : vector<128x256xbf16>, vector<256x256xbf16>, vector<128x256xf32> -> vector<128x256xf32>
    %c0_4 = arith.constant 0 : index
    %c0_5 = arith.constant 0 : index
    %5 = vector.load %arg4[%c0_4, %c0_5] : memref<128x2xf32, #tpu.memory_space<vmem>>, vector<128x1xf32>
    %6 = vector.broadcast %5 : vector<128x1xf32> to vector<128x256xf32>
    %7 = arith.addf %4, %6 : vector<128x256xf32>
    %cst_6 = arith.constant 0.000000e+00 : f32
    %8 = vector.broadcast %cst_6 : f32 to vector<128x256xf32>
    %9 = arith.maximumf %7, %8 : vector<128x256xf32>
    %10 = arith.mulf %9, %9 : vector<128x256xf32>
    %cst_7 = arith.constant dense<0.000000e+00> : vector<256xf32>
    %11 = vector.multi_reduction <add>, %10, %cst_7 [0] : vector<128x256xf32> to vector<256xf32>
    %12 = vector.shape_cast %11 : vector<256xf32> to vector<1x256xf32>
    %cst_8 = arith.constant 9.99999968E-21 : f32
    %13 = vector.broadcast %cst_8 : f32 to vector<1x256xf32>
    %14 = arith.addf %12, %13 : vector<1x256xf32>
    %15 = math.rsqrt %14 : vector<1x256xf32>
    %16 = vector.broadcast %15 : vector<1x256xf32> to vector<128x256xf32>
    %17 = arith.mulf %9, %16 : vector<128x256xf32>
    %c0_9 = arith.constant 0 : index
    %c1 = arith.constant 1 : index
    %18 = vector.load %arg4[%c0_9, %c1] : memref<128x2xf32, #tpu.memory_space<vmem>>, vector<128x1xf32>
    %19 = vector.broadcast %18 : vector<128x1xf32> to vector<128x256xf32>
    %20 = arith.mulf %17, %19 : vector<128x256xf32>
    %c0_10 = arith.constant 0 : index
    %c0_11 = arith.constant 0 : index
    %c0_12 = arith.constant 0 : index
    %21 = vector.load %arg5[%c0_10, %c0_11, %c0_12] : memref<1x128x256xf32, #tpu.memory_space<vmem>>, vector<1x128x256xf32>
    %22 = vector.shape_cast %21 : vector<1x128x256xf32> to vector<128x256xf32>
    %23 = vector.shape_cast %20 : vector<128x256xf32> to vector<1x128x256xf32>
    tpu.vector_store %arg5[%c0_10, %c0_11, %c0_12], %23 {strides = array<i32>} : memref<1x128x256xf32, #tpu.memory_space<vmem>>, vector<1x128x256xf32>,
    return
  }
  func.func @transform_0(%arg0: i32, %arg1: i32) -> (i32, i32, i32) {
    %c0_i32 = arith.constant 0 : i32
    %c0_i32_0 = arith.constant 0 : i32
    return %arg0, %c0_i32, %arg1 : i32, i32, i32
  }
  func.func @transform_1(%arg0: i32, %arg1: i32) -> (i32, i32) {
    %c0_i32 = arith.constant 0 : i32
    %c0_i32_0 = arith.constant 0 : i32
    %c0_i32_1 = arith.constant 0 : i32
    return %c0_i32, %c0_i32_0 : i32, i32
  }
  func.func @transform_2(%arg0: i32, %arg1: i32) -> (i32, i32) {
    %c0_i32 = arith.constant 0 : i32
    %c0_i32_0 = arith.constant 0 : i32
    %c0_i32_1 = arith.constant 0 : i32
    return %c0_i32, %c0_i32_0 : i32, i32
  }
  func.func @transform_3(%arg0: i32, %arg1: i32) -> (i32, i32, i32) {
    %c0_i32 = arith.constant 0 : i32
    %c0_i32_0 = arith.constant 0 : i32
    return %arg0, %c0_i32, %arg1 : i32, i32, i32
  }
}

</mosaic_0001>

<llo_original>
// kernel: seg_head.1
$region0: #{seg_head.1}
  #allocation0 [shape = 'u32[]', space=smem, size = 0x4, offset = 0x4, fixed_abs, tag = 'smem constant byte address 0x4 - core index']
  #allocation1 [shape = 'u32[144,128]{1,0:T(1,128)}', space=vmem, size = 0x12000, scoped, tag = 'internal scratch']
  %s0 = inlined_call_operand.vmem [shape: f32[2,256,256], index: 0, kind: input, shape index: {}]
  %s1 = inlined_call_operand.vmem [shape: bf16[128,256], index: 1, kind: input, shape index: {}]
  %s2 = inlined_call_operand.vmem [shape: f32[128,2], index: 2, kind: input, shape index: {}]
  %s3 = inlined_call_operand.vmem [shape: f32[2,128,256], index: 3, kind: output, shape index: {}]
  %s4 = sld [smem:[#allocation0]]
  $region45: #{seg_head.1} parent=0
    _
  %s6 = ssub.s32 1, %s4
  %s7 = scalar_select 0, %s6, %s4
  loop: start=0, step=1, limit=4
  $region2: #{seg_head.1} parent=0 // loop_pre_header
    _
  $region3: #{seg_head.1} parent=0 // loop_header
    %s9 = sphi 0, %s13
    %p10 = scmp.ge.s32.totalorder %s9, 4
    %s16 = sphi 0, %s28
    %s17 = sphi 0, %s24
    %s18 = sphi 0, %s16
    %s19 = sphi 0, %s17
    %s20 = sphi 0, %s18
    %s21 = sphi 0, %s19
    %s33 = sphi 0, %s35
    %s36 = sphi 0, %s33
    %s37 = sphi 0, %s36
    %s53 = sphi 0, %s37
    %s57 = sphi 0, %s57
    %s59 = sphi 0, %s57
    %s60 = sphi 0, %s59
    %s74 = sphi 0, %s60
    %s78 = sphi 0, %s78
    %s80 = sphi 0, %s78
    %s81 = sphi 0, %s80
    %s95 = sphi 0, %s81
    %s103 = sphi 0, %s105
    %s106 = sphi 0, %s103
    %s107 = sphi 0, %s106
    %s123 = sphi 0, %s107
  $region4: #{seg_head.1} parent=0 // loop_header_branch
    %12 = sbr.rel (%p10) target = $region8
  $region5: #{seg_head.1} parent=0 // loop_body
    %s14 = ssub.s32 %s9, 1
    %s15 = ssub.s32 %s9, 2
    %s22 = sadd.s32 1, %s17
    %p23 = scmp.ge.s32.totalorder %s22, 1
    %s24 = scalar_select %p23, 0, %s22
    %s25 = sadd.s32 1, %s16
    %s26 = scalar_select %p23, %s25, %s16
    %p27 = scmp.ge.s32.totalorder %s26, 2
    %s28 = scalar_select %p27, 0, %s26
    %s29 = ssub.s32 %s16, %s28
    %s30 = ssub.s32 %s17, %s24
    %s31 = sor.u32 %s29, %s30
    %p32 = scmp.eq.s32.totalorder %s31, 0
    %s34 = sadd.s32 %s33, 1
    %s35 = scalar_select %p32, %s33, %s34
    %p38 = pneg %p32
    %p39 = scmp.eq.s32.totalorder %s9, 1
    %p40 = por %p38, %p39
    %p41 = scmp.ne.s32.totalorder %s33, %s36
    %p42 = scmp.eq.s32.totalorder %s9, 0
    %p43 = por %p41, %p42
    %p44 = scmp.ne.s32.totalorder %s33, %s36
    %p45 = scmp.eq.s32.totalorder %s14, 1
    %p46 = por %p44, %p45
    %p47 = scmp.ne.s32.totalorder %s36, %s37
    %p48 = scmp.eq.s32.totalorder %s14, 0
    %p49 = por %p47, %p48
    %p50 = scmp.ne.s32.totalorder %s36, %s37
    %p51 = scmp.eq.s32.totalorder %s15, 1
    %p52 = por %p50, %p51
    %p54 = scmp.ne.s32.totalorder %s37, %s53
    %p55 = scmp.eq.s32.totalorder %s15, 0
    %p56 = por %p54, %p55
    %s58 = sadd.s32 %s57, 1
    %p61 = scmp.eq.s32.totalorder %s9, 1
    %p62 = scmp.ne.s32.totalorder %s57, %s59
    %p63 = scmp.eq.s32.totalorder %s9, 0
    %p64 = por %p62, %p63
    %p65 = scmp.ne.s32.totalorder %s57, %s59
    %p66 = scmp.eq.s32.totalorder %s14, 1
    %p67 = por %p65, %p66
    %p68 = scmp.ne.s32.totalorder %s59, %s60
    %p69 = scmp.eq.s32.totalorder %s14, 0
    %p70 = por %p68, %p69
    %p71 = scmp.ne.s32.totalorder %s59, %s60
    %p72 = scmp.eq.s32.totalorder %s15, 1
    %p73 = por %p71, %p72
    %p75 = scmp.ne.s32.totalorder %s60, %s74
    %p76 = scmp.eq.s32.totalorder %s15, 0
    %p77 = por %p75, %p76
    %s79 = sadd.s32 %s78, 1
    %p82 = scmp.eq.s32.totalorder %s9, 1
    %p83 = scmp.ne.s32.totalorder %s78, %s80
    %p84 = scmp.eq.s32.totalorder %s9, 0
    %p85 = por %p83, %p84
    %p86 = scmp.ne.s32.totalorder %s78, %s80
    %p87 = scmp.eq.s32.totalorder %s14, 1
    %p88 = por %p86, %p87
    %p89 = scmp.ne.s32.totalorder %s80, %s81
    %p90 = scmp.eq.s32.totalorder %s14, 0
    %p91 = por %p89, %p90
    %p92 = scmp.ne.s32.totalorder %s80, %s81
    %p93 = scmp.eq.s32.totalorder %s15, 1
    %p94 = por %p92, %p93
    %p96 = scmp.ne.s32.totalorder %s81, %s95
    %p97 = scmp.eq.s32.totalorder %s15, 0
    %p98 = por %p96, %p97
    %s99 = ssub.s32 %s16, %s28
    %s100 = ssub.s32 %s17, %s24
    %s101 = sor.u32 %s99, %s100
    %p102 = scmp.eq.s32.totalorder %s101, 0
    %s104 = sadd.s32 %s103, 1
    %s105 = scalar_select %p102, %s103, %s104
    %p108 = pneg %p102
    %p109 = scmp.eq.s32.totalorder %s9, 1
    %p110 = por %p108, %p109
    %p111 = scmp.ne.s32.totalorder %s103, %s106
    %p112 = scmp.eq.s32.totalorder %s9, 0
    %p113 = por %p111, %p112
    %p114 = scmp.ne.s32.totalorder %s103, %s106
    %p115 = scmp.eq.s32.totalorder %s14, 1
    %p116 = por %p114, %p115
    %p117 = scmp.ne.s32.totalorder %s106, %s107
    %p118 = scmp.eq.s32.totalorder %s14, 0
    %p119 = por %p117, %p118
    %p120 = scmp.ne.s32.totalorder %s106, %s107
    %p121 = scmp.eq.s32.totalorder %s15, 1
    %p122 = por %p120, %p121
    %p124 = scmp.ne.s32.totalorder %s107, %s123
    %p125 = scmp.eq.s32.totalorder %s15, 0
    %p126 = por %p124, %p125
    %p127 = scmp.le.s32.totalorder 1, %s9
    %p128 = scmp.lt.s32.totalorder %s9, 3
    %p129 = pnand %p127, %p128
    %p130 = pneg %p129
    // Predicated region
    $region9: #{seg_head.1} parent=5 // pred_check
      _
    $region10: #{seg_head.1} parent=5 // pred_check_branch
      %132 = sbr.rel (%p129) target = $region12
    $region11: #{seg_head.1} parent=5 // pred_region
      %s133 = ssub.s32 %s9, 1
      // Predicated region
      $region13: #{seg_head.1} parent=11 // pred_check
        %p134 = pneg %p70
      $region14: #{seg_head.1} parent=11 // pred_check_branch
        %136 = sbr.rel (%p134) target = $region16
      $region15: #{seg_head.1} parent=11 // pred_region
        _
      $region16: #{seg_head.1} parent=11 // pred_fallthru
        _
      // Predicated region
      $region17: #{seg_head.1} parent=11 // pred_check
        %p137 = pneg %p91
      $region18: #{seg_head.1} parent=11 // pred_check_branch
        %139 = sbr.rel (%p137) target = $region20
      $region19: #{seg_head.1} parent=11 // pred_region
        _
      $region20: #{seg_head.1} parent=11 // pred_fallthru
        _
    $region12: #{seg_head.1} parent=5 // pred_fallthru
      _
    %p140 = scmp.lt.s32.totalorder %s9, 2
    // Predicated region
    $region21: #{seg_head.1} parent=5 // pred_check
      %p141 = pneg %p140
    $region22: #{seg_head.1} parent=5 // pred_check_branch
      %143 = sbr.rel (%p141) target = $region24
    $region23: #{seg_head.1} parent=5 // pred_region
      // Predicated region
      $region25: #{seg_head.1} parent=23 // pred_check
        %p144 = pneg %p43
      $region26: #{seg_head.1} parent=23 // pred_check_branch
        %146 = sbr.rel (%p144) target = $region28
      $region27: #{seg_head.1} parent=23 // pred_region
        %s147 = smul.u32 2, %s17
        %p148 = scmp.lt.s32.totalorder %s16, 1
        %s149 = scalar_select %p148, %s16, 1
        %p150 = scmp.lt.s32.totalorder %s147, 1
        %s151 = scalar_select %p150, %s147, 1
        %s152 = smul.addr %s149, 64
        %s153 = sadd.s32 %s151, %s152
        %s154 = smul.addr %s153, 8
        %s155 = scalar_lea.vmem %s0, %s154
        %s156 = smul.u32 2, %s17
      $region28: #{seg_head.1} parent=23 // pred_fallthru
        _
    $region24: #{seg_head.1} parent=5 // pred_fallthru
      _
    %p157 = scmp.le.s32.totalorder 1, %s9
    %p158 = scmp.lt.s32.totalorder %s9, 3
    %p159 = pnand %p157, %p158
    %p160 = pneg %p159
    // Predicated region
    $region29: #{seg_head.1} parent=5 // pred_check
      _
    $region30: #{seg_head.1} parent=5 // pred_check_branch
      %162 = sbr.rel (%p159) target = $region32
    $region31: #{seg_head.1} parent=5 // pred_region
      %s163 = ssub.s32 %s9, 1
      %s164 = smul.u32 2, %s19
      %p165 = scmp.lt.s32.totalorder %s18, 1
      %s166 = scalar_select %p165, %s18, 1
      %p167 = scmp.lt.s32.totalorder %s164, 1
      %s168 = scalar_select %p167, %s164, 1
      %s169 = smul.addr %s166, 64
      %s170 = sadd.s32 %s168, %s169
      %s171 = smul.addr %s170, 8
      %s172 = scalar_lea.vmem %s0, %s171
      %p173 = pneg %p49
      %p174 = pneg %p46
      %p175 = pneg %p70
      %p176 = pneg %p67
      %p177 = pneg %p91
      %p178 = pneg %p88
      %p179 = pneg %p119
      %p180 = pneg %p116
      %s181 = smul.u32 2, %s19
      %p182 = scmp.lt.s32.totalorder %s18, 1
      %s183 = scalar_select %p182, %s18, 1
      %p184 = scmp.lt.s32.totalorder %s181, 1
      %s185 = scalar_select %p184, %s181, 1
      %s186 = smul.addr %s183, 32
      %s187 = sadd.s32 %s185, %s186
      %s188 = smul.addr %s187, 8
      %s189 = scalar_lea.vmem %s3, %s188
      %s190 = smul.u32 2, %s19
      %p191 = scmp.lt.s32.totalorder %s18, 1
      %s192 = scalar_select %p191, %s18, 1
      %p193 = scmp.lt.s32.totalorder %s190, 1
      %s194 = scalar_select %p193, %s190, 1
      %s195 = smul.addr %s192, 64
      %s196 = sadd.s32 %s194, %s195
      %s197 = smul.addr %s196, 8
      %s198 = scalar_lea.vmem %s0, %s197
      %s199 = smul.u32 2, %s19
      %s200 = smul.u32 2, %s19
      %p201 = scmp.lt.s32.totalorder %s18, 1
      %s202 = scalar_select %p201, %s18, 1
      %p203 = scmp.lt.s32.totalorder %s200, 1
      %s204 = scalar_select %p203, %s200, 1
      %s205 = smul.addr %s202, 32
      %s206 = sadd.s32 %s204, %s205
      %s207 = smul.addr %s206, 8
      %s208 = scalar_lea.vmem %s3, %s207
      %s209 = smul.u32 2, %s19
      %v210 = vld [vmem:[%s198] sm:$0xff]
      %v211 = vld [vmem:[%s198 + $0x8] sm:$0xff]
      %v212 = vld [vmem:[%s198 + $0x10] sm:$0xff]
      %v213 = vld [vmem:[%s198 + $0x18] sm:$0xff]
      %v214 = vld [vmem:[%s198 + $0x20] sm:$0xff]
      %v215 = vld [vmem:[%s198 + $0x28] sm:$0xff]
      %v216 = vld [vmem:[%s198 + $0x30] sm:$0xff]
      %v217 = vld [vmem:[%s198 + $0x38] sm:$0xff]
      %v218 = vld [vmem:[%s198 + $0x40] sm:$0xff]
      %v219 = vld [vmem:[%s198 + $0x48] sm:$0xff]
      %v220 = vld [vmem:[%s198 + $0x50] sm:$0xff]
      %v221 = vld [vmem:[%s198 + $0x58] sm:$0xff]
      %v222 = vld [vmem:[%s198 + $0x60] sm:$0xff]
      %v223 = vld [vmem:[%s198 + $0x68] sm:$0xff]
      %v224 = vld [vmem:[%s198 + $0x70] sm:$0xff]
      %v225 = vld [vmem:[%s198 + $0x78] sm:$0xff]
      %v226 = vld [vmem:[%s198 + $0x80] sm:$0xff]
      %v227 = vld [vmem:[%s198 + $0x88] sm:$0xff]
      %v228 = vld [vmem:[%s198 + $0x90] sm:$0xff]
      %v229 = vld [vmem:[%s198 + $0x98] sm:$0xff]
      %v230 = vld [vmem:[%s198 + $0xa0] sm:$0xff]
      %v231 = vld [vmem:[%s198 + $0xa8] sm:$0xff]
      %v232 = vld [vmem:[%s198 + $0xb0] sm:$0xff]
      %v233 = vld [vmem:[%s198 + $0xb8] sm:$0xff]
      %v234 = vld [vmem:[%s198 + $0xc0] sm:$0xff]
      %v235 = vld [vmem:[%s198 + $0xc8] sm:$0xff]
      %v236 = vld [vmem:[%s198 + $0xd0] sm:$0xff]
      %v237 = vld [vmem:[%s198 + $0xd8] sm:$0xff]
      %v238 = vld [vmem:[%s198 + $0xe0] sm:$0xff]
      %v239 = vld [vmem:[%s198 + $0xe8] sm:$0xff]
      %v240 = vld [vmem:[%s198 + $0xf0] sm:$0xff]
      %v241 = vld [vmem:[%s198 + $0xf8] sm:$0xff]
      %v242 = vld [vmem:[%s198 + $0x100] sm:$0xff]
      %v243 = vld [vmem:[%s198 + $0x108] sm:$0xff]
      %v244 = vld [vmem:[%s198 + $0x110] sm:$0xff]
      %v245 = vld [vmem:[%s198 + $0x118] sm:$0xff]
      %v246 = vld [vmem:[%s198 + $0x120] sm:$0xff]
      %v247 = vld [vmem:[%s198 + $0x128] sm:$0xff]
      %v248 = vld [vmem:[%s198 + $0x130] sm:$0xff]
      %v249 = vld [vmem:[%s198 + $0x138] sm:$0xff]
      %v250 = vld [vmem:[%s198 + $0x140] sm:$0xff]
      %v251 = vld [vmem:[%s198 + $0x148] sm:$0xff]
      %v252 = vld [vmem:[%s198 + $0x150] sm:$0xff]
      %v253 = vld [vmem:[%s198 + $0x158] sm:$0xff]
      %v254 = vld [vmem:[%s198 + $0x160] sm:$0xff]
      %v255 = vld [vmem:[%s198 + $0x168] sm:$0xff]
      %v256 = vld [vmem:[%s198 + $0x170] sm:$0xff]
      %v257 = vld [vmem:[%s198 + $0x178] sm:$0xff]
      %v258 = vld [vmem:[%s198 + $0x180] sm:$0xff]
      %v259 = vld [vmem:[%s198 + $0x188] sm:$0xff]
      %v260 = vld [vmem:[%s198 + $0x190] sm:$0xff]
      %v261 = vld [vmem:[%s198 + $0x198] sm:$0xff]
      %v262 = vld [vmem:[%s198 + $0x1a0] sm:$0xff]
      %v263 = vld [vmem:[%s198 + $0x1a8] sm:$0xff]
      %v264 = vld [vmem:[%s198 + $0x1b0] sm:$0xff]
      %v265 = vld [vmem:[%s198 + $0x1b8] sm:$0xff]
      %v266 = vld [vmem:[%s198 + $0x1c0] sm:$0xff]
      %v267 = vld [vmem:[%s198 + $0x1c8] sm:$0xff]
      %v268 = vld [vmem:[%s198 + $0x1d0] sm:$0xff]
      %v269 = vld [vmem:[%s198 + $0x1d8] sm:$0xff]
      %v270 = vld [vmem:[%s198 + $0x1e0] sm:$0xff]
      %v271 = vld [vmem:[%s198 + $0x1e8] sm:$0xff]
      %v272 = vld [vmem:[%s198 + $0x1f0] sm:$0xff]
      %v273 = vld [vmem:[%s198 + $0x1f8] sm:$0xff]
      %v274 = vpack.c.bf16 %v212, %v210
      %v275 = vpack.c.bf16 %v213, %v211
      %v276 = vpack.c.bf16 %v216, %v214
      %v277 = vpack.c.bf16 %v217, %v215
      %v278 = vpack.c.bf16 %v220, %v218
      %v279 = vpack.c.bf16 %v221, %v219
      %v280 = vpack.c.bf16 %v224, %v222
      %v281 = vpack.c.bf16 %v225, %v223
      %v282 = vpack.c.bf16 %v228, %v226
      %v283 = vpack.c.bf16 %v229, %v227
      %v284 = vpack.c.bf16 %v232, %v230
      %v285 = vpack.c.bf16 %v233, %v231
      %v286 = vpack.c.bf16 %v236, %v234
      %v287 = vpack.c.bf16 %v237, %v235
      %v288 = vpack.c.bf16 %v240, %v238
      %v289 = vpack.c.bf16 %v241, %v239
      %v290 = vpack.c.bf16 %v244, %v242
      %v291 = vpack.c.bf16 %v245, %v243
      %v292 = vpack.c.bf16 %v248, %v246
      %v293 = vpack.c.bf16 %v249, %v247
      %v294 = vpack.c.bf16 %v252, %v250
      %v295 = vpack.c.bf16 %v253, %v251
      %v296 = vpack.c.bf16 %v256, %v254
      %v297 = vpack.c.bf16 %v257, %v255
      %v298 = vpack.c.bf16 %v260, %v258
      %v299 = vpack.c.bf16 %v261, %v259
      %v300 = vpack.c.bf16 %v264, %v262
      %v301 = vpack.c.bf16 %v265, %v263
      %v302 = vpack.c.bf16 %v268, %v266
      %v303 = vpack.c.bf16 %v269, %v267
      %v304 = vpack.c.bf16 %v272, %v270
      %v305 = vpack.c.bf16 %v273, %v271
      %v306 = vld [vmem:[%s1] sm:$0xff]
      %v307 = vld [vmem:[%s1 + $0x8] sm:$0xff]
      %v308 = vld [vmem:[%s1 + $0x10] sm:$0xff]
      %v309 = vld [vmem:[%s1 + $0x18] sm:$0xff]
      %v310 = vld [vmem:[%s1 + $0x20] sm:$0xff]
      %v311 = vld [vmem:[%s1 + $0x28] sm:$0xff]
      %v312 = vld [vmem:[%s1 + $0x30] sm:$0xff]
      %v313 = vld [vmem:[%s1 + $0x38] sm:$0xff]
      %v314 = vld [vmem:[%s1 + $0x40] sm:$0xff]
      %v315 = vld [vmem:[%s1 + $0x48] sm:$0xff]
      %v316 = vld [vmem:[%s1 + $0x50] sm:$0xff]
      %v317 = vld [vmem:[%s1 + $0x58] sm:$0xff]
      %v318 = vld [vmem:[%s1 + $0x60] sm:$0xff]
      %v319 = vld [vmem:[%s1 + $0x68] sm:$0xff]
      %v320 = vld [vmem:[%s1 + $0x70] sm:$0xff]
      %v321 = vld [vmem:[%s1 + $0x78] sm:$0xff]
      %v322 = vld [vmem:[%s2] sm:$0xff]
      %v323 = vld [vmem:[%s2 + $0x8] sm:$0xff]
      %v324 = vld [vmem:[%s2 + $0x10] sm:$0xff]
      %v325 = vld [vmem:[%s2 + $0x18] sm:$0xff]
      %v326 = vld [vmem:[%s2 + $0x20] sm:$0xff]
      %v327 = vld [vmem:[%s2 + $0x28] sm:$0xff]
      %v328 = vld [vmem:[%s2 + $0x30] sm:$0xff]
      %v329 = vld [vmem:[%s2 + $0x38] sm:$0xff]
      %v330 = vld [vmem:[%s2 + $0x40] sm:$0xff]
      %v331 = vld [vmem:[%s2 + $0x48] sm:$0xff]
      %v332 = vld [vmem:[%s2 + $0x50] sm:$0xff]
      %v333 = vld [vmem:[%s2 + $0x58] sm:$0xff]
      %v334 = vld [vmem:[%s2 + $0x60] sm:$0xff]
      %v335 = vld [vmem:[%s2 + $0x68] sm:$0xff]
      %v336 = vld [vmem:[%s2 + $0x70] sm:$0xff]
      %v337 = vld [vmem:[%s2 + $0x78] sm:$0xff]
      %339 = vset.pattern.permute.xlu0 0
      %340 = vperm.xlu0 %339, %v322
      %v341 = vpop.permute.xlu0 %340
      %344 = vset.pattern.permute.xlu0 0
      %345 = vperm.xlu0 %344, %v323
      %v346 = vpop.permute.xlu0 %345
      %349 = vset.pattern.permute.xlu0 0
      %350 = vperm.xlu0 %349, %v324
      %v351 = vpop.permute.xlu0 %350
      %354 = vset.pattern.permute.xlu0 0
      %355 = vperm.xlu0 %354, %v325
      %v356 = vpop.permute.xlu0 %355
      %359 = vset.pattern.permute.xlu0 0
      %360 = vperm.xlu0 %359, %v326
      %v361 = vpop.permute.xlu0 %360
      %364 = vset.pattern.permute.xlu0 0
      %365 = vperm.xlu0 %364, %v327
      %v366 = vpop.permute.xlu0 %365
      %369 = vset.pattern.permute.xlu0 0
      %370 = vperm.xlu0 %369, %v328
      %v371 = vpop.permute.xlu0 %370
      %374 = vset.pattern.permute.xlu0 0
      %375 = vperm.xlu0 %374, %v329
      %v376 = vpop.permute.xlu0 %375
      %379 = vset.pattern.permute.xlu0 0
      %380 = vperm.xlu0 %379, %v330
      %v381 = vpop.permute.xlu0 %380
      %384 = vset.pattern.permute.xlu0 0
      %385 = vperm.xlu0 %384, %v331
      %v386 = vpop.permute.xlu0 %385
      %389 = vset.pattern.permute.xlu0 0
      %390 = vperm.xlu0 %389, %v332
      %v391 = vpop.permute.xlu0 %390
      %394 = vset.pattern.permute.xlu0 0
      %395 = vperm.xlu0 %394, %v333
      %v396 = vpop.permute.xlu0 %395
      %399 = vset.pattern.permute.xlu0 0
      %400 = vperm.xlu0 %399, %v334
      %v401 = vpop.permute.xlu0 %400
      %404 = vset.pattern.permute.xlu0 0
      %405 = vperm.xlu0 %404, %v335
      %v406 = vpop.permute.xlu0 %405
      %409 = vset.pattern.permute.xlu0 0
      %410 = vperm.xlu0 %409, %v336
      %v411 = vpop.permute.xlu0 %410
      %414 = vset.pattern.permute.xlu0 0
      %415 = vperm.xlu0 %414, %v337
      %v416 = vpop.permute.xlu0 %415
      %v434 = vunpack.c.l.b16 %v306
      %v435 = vunpack.c.h.b16 %v306
      %v436 = vunpack.c.l.b16 %v307
      %v437 = vunpack.c.h.b16 %v307
      %v438 = vunpack.c.l.b16 %v308
      %v439 = vunpack.c.h.b16 %v308
      %v440 = vunpack.c.l.b16 %v309
      %v441 = vunpack.c.h.b16 %v309
      %v442 = vunpack.c.l.b16 %v310
      %v443 = vunpack.c.h.b16 %v310
      %v444 = vunpack.c.l.b16 %v311
      %v445 = vunpack.c.h.b16 %v311
      %v446 = vunpack.c.l.b16 %v312
      %v447 = vunpack.c.h.b16 %v312
      %v448 = vunpack.c.l.b16 %v313
      %v449 = vunpack.c.h.b16 %v313
      %v450 = vunpack.c.l.b16 %v314
      %v451 = vunpack.c.h.b16 %v314
      %v452 = vunpack.c.l.b16 %v315
      %v453 = vunpack.c.h.b16 %v315
      %v454 = vunpack.c.l.b16 %v316
      %v455 = vunpack.c.h.b16 %v316
      %v456 = vunpack.c.l.b16 %v317
      %v457 = vunpack.c.h.b16 %v317
      %v458 = vunpack.c.l.b16 %v318
      %v459 = vunpack.c.h.b16 %v318
      %v460 = vunpack.c.l.b16 %v319
      %v461 = vunpack.c.h.b16 %v319
      %v462 = vunpack.c.l.b16 %v320
      %v463 = vunpack.c.h.b16 %v320
      %v464 = vunpack.c.l.b16 %v321
      %v465 = vunpack.c.h.b16 %v321
      %v466 = vpack.c.b16 %v436, %v434
      %v467 = vpack.c.b16 %v437, %v435
      %v468 = vpack.c.b16 %v440, %v438
      %v469 = vpack.c.b16 %v441, %v439
      %v470 = vpack.c.b16 %v444, %v442
      %v471 = vpack.c.b16 %v445, %v443
      %v472 = vpack.c.b16 %v448, %v446
      %v473 = vpack.c.b16 %v449, %v447
      %v474 = vpack.c.b16 %v452, %v450
      %v475 = vpack.c.b16 %v453, %v451
      %v476 = vpack.c.b16 %v456, %v454
      %v477 = vpack.c.b16 %v457, %v455
      %v478 = vpack.c.b16 %v460, %v458
      %v479 = vpack.c.b16 %v461, %v459
      %v480 = vpack.c.b16 %v464, %v462
      %v481 = vpack.c.b16 %v465, %v463
      %498 = vmatprep.subr.bf16.mxu0 %v275
      %499 = vmatpush1.bf16.msra.mxu0 %v274
      %500 = vmatprep.subr.bf16.mxu0 %v277
      %501 = vmatpush1.bf16.msra.mxu0 %v276
      %502 = vmatprep.subr.bf16.mxu0 %v279
      %503 = vmatpush1.bf16.msra.mxu0 %v278
      %504 = vmatprep.subr.bf16.mxu0 %v281
      %505 = vmatpush1.bf16.msra.mxu0 %v280
      %506 = vmatprep.subr.bf16.mxu0 %v283
      %507 = vmatpush1.bf16.msra.mxu0 %v282
      %508 = vmatprep.subr.bf16.mxu0 %v285
      %509 = vmatpush1.bf16.msra.mxu0 %v284
      %510 = vmatprep.subr.bf16.mxu0 %v287
      %511 = vmatpush1.bf16.msra.mxu0 %v286
      %512 = vmatprep.subr.bf16.mxu0 %v289
      %513 = vmatpush1.bf16.msra.mxu0 %v288
      %514 = vmatprep.subr.bf16.mxu0 %v291
      %515 = vmatpush1.bf16.msra.mxu0 %v290
      %516 = vmatprep.subr.bf16.mxu0 %v293
      %517 = vmatpush1.bf16.msra.mxu0 %v292
      %518 = vmatprep.subr.bf16.mxu0 %v295
      %519 = vmatpush1.bf16.msra.mxu0 %v294
      %520 = vmatprep.subr.bf16.mxu0 %v297
      %521 = vmatpush1.bf16.msra.mxu0 %v296
      %522 = vmatprep.subr.bf16.mxu0 %v299
      %523 = vmatpush1.bf16.msra.mxu0 %v298
      %524 = vmatprep.subr.bf16.mxu0 %v301
      %525 = vmatpush1.bf16.msra.mxu0 %v300
      %526 = vmatprep.subr.bf16.mxu0 %v303
      %527 = vmatpush1.bf16.msra.mxu0 %v302
      %528 = vmatprep.subr.bf16.mxu0 %v305
      %529 = vmatpush1.bf16.msra.mxu0 %v304
      %530 = vmatprep.mubr.bf16.mxu0 %v467
      %531 = vmatmul.mubr.bf16.gmra.mrb[0].mxu0 %v466
      %v532 = vpop.f32.mrb[0].mxu0
      %v533 = vadd.f32 %v341, %v532
      %v534 = vpop.f32.mrb[0].mxu0
      %v535 = vadd.f32 %v341, %v534
      %v536 = vpop.f32.mrb[0].mxu0
      %v537 = vadd.f32 %v346, %v536
      %v538 = vpop.f32.mrb[0].mxu0
      %v539 = vadd.f32 %v346, %v538
      %540 = vmatprep.mubr.bf16.mxu0 %v469
      %541 = vmatmul.mubr.bf16.gmra.mrb[0].mxu0 %v468
      %v542 = vpop.f32.mrb[0].mxu0
      %v543 = vadd.f32 %v351, %v542
      %v544 = vpop.f32.mrb[0].mxu0
      %v545 = vadd.f32 %v351, %v544
      %v546 = vpop.f32.mrb[0].mxu0
      %v547 = vadd.f32 %v356, %v546
      %v548 = vpop.f32.mrb[0].mxu0
      %v549 = vadd.f32 %v356, %v548
      %550 = vmatprep.mubr.bf16.mxu0 %v471
      %551 = vmatmul.mubr.bf16.gmra.mrb[0].mxu0 %v470
      %v552 = vpop.f32.mrb[0].mxu0
      %v553 = vadd.f32 %v361, %v552
      %v554 = vpop.f32.mrb[0].mxu0
      %v555 = vadd.f32 %v361, %v554
      %v556 = vpop.f32.mrb[0].mxu0
      %v557 = vadd.f32 %v366, %v556
      %v558 = vpop.f32.mrb[0].mxu0
      %v559 = vadd.f32 %v366, %v558
      %560 = vmatprep.mubr.bf16.mxu0 %v473
      %561 = vmatmul.mubr.bf16.gmra.mrb[0].mxu0 %v472
      %v562 = vpop.f32.mrb[0].mxu0
      %v563 = vadd.f32 %v371, %v562
      %v564 = vpop.f32.mrb[0].mxu0
      %v565 = vadd.f32 %v371, %v564
      %v566 = vpop.f32.mrb[0].mxu0
      %v567 = vadd.f32 %v376, %v566
      %v568 = vpop.f32.mrb[0].mxu0
      %v569 = vadd.f32 %v376, %v568
      %570 = vmatprep.mubr.bf16.mxu0 %v475
      %571 = vmatmul.mubr.bf16.gmra.mrb[0].mxu0 %v474
      %v572 = vpop.f32.mrb[0].mxu0
      %v573 = vadd.f32 %v381, %v572
      %v574 = vpop.f32.mrb[0].mxu0
      %v575 = vadd.f32 %v381, %v574
      %v576 = vpop.f32.mrb[0].mxu0
      %v577 = vadd.f32 %v386, %v576
      %v578 = vpop.f32.mrb[0].mxu0
      %v579 = vadd.f32 %v386, %v578
      %580 = vmatprep.mubr.bf16.mxu0 %v477
      %581 = vmatmul.mubr.bf16.gmra.mrb[0].mxu0 %v476
      %v582 = vpop.f32.mrb[0].mxu0
      %v583 = vadd.f32 %v391, %v582
      %v584 = vpop.f32.mrb[0].mxu0
      %v585 = vadd.f32 %v391, %v584
      %v586 = vpop.f32.mrb[0].mxu0
      %v587 = vadd.f32 %v396, %v586
      %v588 = vpop.f32.mrb[0].mxu0
      %v589 = vadd.f32 %v396, %v588
      %590 = vmatprep.mubr.bf16.mxu0 %v479
      %591 = vmatmul.mubr.bf16.gmra.mrb[0].mxu0 %v478
      %v592 = vpop.f32.mrb[0].mxu0
      %v593 = vadd.f32 %v401, %v592
      %v594 = vpop.f32.mrb[0].mxu0
      %v595 = vadd.f32 %v401, %v594
      %v596 = vpop.f32.mrb[0].mxu0
      %v597 = vadd.f32 %v406, %v596
      %v598 = vpop.f32.mrb[0].mxu0
      %v599 = vadd.f32 %v406, %v598
      %600 = vmatprep.mubr.bf16.mxu0 %v481
      %601 = vmatmul.mubr.bf16.gmra.mrb[0].mxu0 %v480
      %v602 = vpop.f32.mrb[0].mxu0
      %v603 = vadd.f32 %v411, %v602
      %v604 = vpop.f32.mrb[0].mxu0
      %v605 = vadd.f32 %v411, %v604
      %v606 = vpop.f32.mrb[0].mxu0
      %v607 = vadd.f32 %v416, %v606
      %v608 = vpop.f32.mrb[0].mxu0
      %v609 = vadd.f32 %v416, %v608
      %610 = vdwg.mxu0
      %v611 = vmax.f32 %v533, 0.0
      %v612 = vmax.f32 %v535, 0.0
      %v613 = vmax.f32 %v537, 0.0
      %v614 = vmax.f32 %v539, 0.0
      %v615 = vmax.f32 %v543, 0.0
      %v616 = vmax.f32 %v545, 0.0
      %v617 = vmax.f32 %v547, 0.0
      %v618 = vmax.f32 %v549, 0.0
      %v619 = vmax.f32 %v553, 0.0
      %v620 = vmax.f32 %v555, 0.0
      %v621 = vmax.f32 %v557, 0.0
      %v622 = vmax.f32 %v559, 0.0
      %v623 = vmax.f32 %v563, 0.0
      %v624 = vmax.f32 %v565, 0.0
      %v625 = vmax.f32 %v567, 0.0
      %v626 = vmax.f32 %v569, 0.0
      %v627 = vmax.f32 %v573, 0.0
      %v628 = vmax.f32 %v575, 0.0
      %v629 = vmax.f32 %v577, 0.0
      %v630 = vmax.f32 %v579, 0.0
      %v631 = vmax.f32 %v583, 0.0
      %v632 = vmax.f32 %v585, 0.0
      %v633 = vmax.f32 %v587, 0.0
      %v634 = vmax.f32 %v589, 0.0
      %v635 = vmax.f32 %v593, 0.0
      %v636 = vmax.f32 %v595, 0.0
      %v637 = vmax.f32 %v597, 0.0
      %v638 = vmax.f32 %v599, 0.0
      %v639 = vmax.f32 %v603, 0.0
      %v640 = vmax.f32 %v605, 0.0
      %v641 = vmax.f32 %v607, 0.0
      %v642 = vmax.f32 %v609, 0.0
      %v643 = vmul.f32 %v611, %v611
      %v644 = vmul.f32 %v612, %v612
      %v645 = vmul.f32 %v613, %v613
      %v646 = vmul.f32 %v614, %v614
      %v647 = vmul.f32 %v615, %v615
      %v648 = vmul.f32 %v616, %v616
      %v649 = vmul.f32 %v617, %v617
      %v650 = vmul.f32 %v618, %v618
      %v651 = vmul.f32 %v619, %v619
      %v652 = vmul.f32 %v620, %v620
      %v653 = vmul.f32 %v621, %v621
      %v654 = vmul.f32 %v622, %v622
      %v655 = vmul.f32 %v623, %v623
      %v656 = vmul.f32 %v624, %v624
      %v657 = vmul.f32 %v625, %v625
      %v658 = vmul.f32 %v626, %v626
      %v659 = vmul.f32 %v627, %v627
      %v660 = vmul.f32 %v628, %v628
      %v661 = vmul.f32 %v629, %v629
      %v662 = vmul.f32 %v630, %v630
      %v663 = vmul.f32 %v631, %v631
      %v664 = vmul.f32 %v632, %v632
      %v665 = vmul.f32 %v633, %v633
      %v666 = vmul.f32 %v634, %v634
      %v667 = vmul.f32 %v635, %v635
      %v668 = vmul.f32 %v636, %v636
      %v669 = vmul.f32 %v637, %v637
      %v670 = vmul.f32 %v638, %v638
      %v671 = vmul.f32 %v639, %v639
      %v672 = vmul.f32 %v640, %v640
      %v673 = vmul.f32 %v641, %v641
      %v674 = vmul.f32 %v642, %v642
      %v675 = vadd.f32 %v643, %v645
      %v676 = vadd.f32 %v675, %v647
      %v677 = vadd.f32 %v676, %v649
      %v678 = vadd.f32 %v677, %v651
      %v679 = vadd.f32 %v678, %v653
      %v680 = vadd.f32 %v679, %v655
      %v681 = vadd.f32 %v680, %v657
      %v682 = vadd.f32 %v681, %v659
      %v683 = vadd.f32 %v682, %v661
      %v684 = vadd.f32 %v683, %v663
      %v685 = vadd.f32 %v684, %v665
      %v686 = vadd.f32 %v685, %v667
      %v687 = vadd.f32 %v686, %v669
      %v688 = vadd.f32 %v687, %v671
      %v689 = vadd.f32 %v688, %v673
      %v690 = vrot.slane %v689, 4
      %v691 = vadd.f32 %v689, %v690
      %v692 = vrot.slane %v691, 2
      %v693 = vadd.f32 %v691, %v692
      %v694 = vrot.slane %v693, 1
      %v695 = vadd.f32 %v693, %v694
      %v696 = vadd.f32 %v644, %v646
      %v697 = vadd.f32 %v696, %v648
      %v698 = vadd.f32 %v697, %v650
      %v699 = vadd.f32 %v698, %v652
      %v700 = vadd.f32 %v699, %v654
      %v701 = vadd.f32 %v700, %v656
      %v702 = vadd.f32 %v701, %v658
      %v703 = vadd.f32 %v702, %v660
      %v704 = vadd.f32 %v703, %v662
      %v705 = vadd.f32 %v704, %v664
      %v706 = vadd.f32 %v705, %v666
      %v707 = vadd.f32 %v706, %v668
      %v708 = vadd.f32 %v707, %v670
      %v709 = vadd.f32 %v708, %v672
      %v710 = vadd.f32 %v709, %v674
      %v711 = vrot.slane %v710, 4
      %v712 = vadd.f32 %v710, %v711
      %v713 = vrot.slane %v712, 2
      %v714 = vadd.f32 %v712, %v713
      %v715 = vrot.slane %v714, 1
      %v716 = vadd.f32 %v714, %v715
      %v717 = vadd.f32 %v695, 1e-20
      %v718 = vadd.f32 %v716, 1e-20
      %v719 = vrsqrt.pop %v717
      %v720 = vrsqrt.pop %v718
      %v721 = vmul.f32 %v611, %v719
      %v722 = vmul.f32 %v612, %v720
      %v723 = vmul.f32 %v613, %v719
      %v724 = vmul.f32 %v614, %v720
      %v725 = vmul.f32 %v615, %v719
      %v726 = vmul.f32 %v616, %v720
      %v727 = vmul.f32 %v617, %v719
      %v728 = vmul.f32 %v618, %v720
      %v729 = vmul.f32 %v619, %v719
      %v730 = vmul.f32 %v620, %v720
      %v731 = vmul.f32 %v621, %v719
      %v732 = vmul.f32 %v622, %v720
      %v733 = vmul.f32 %v623, %v719
      %v734 = vmul.f32 %v624, %v720
      %v735 = vmul.f32 %v625, %v719
      %v736 = vmul.f32 %v626, %v720
      %v737 = vmul.f32 %v627, %v719
      %v738 = vmul.f32 %v628, %v720
      %v739 = vmul.f32 %v629, %v719
      %v740 = vmul.f32 %v630, %v720
      %v741 = vmul.f32 %v631, %v719
      %v742 = vmul.f32 %v632, %v720
      %v743 = vmul.f32 %v633, %v719
      %v744 = vmul.f32 %v634, %v720
      %v745 = vmul.f32 %v635, %v719
      %v746 = vmul.f32 %v636, %v720
      %v747 = vmul.f32 %v637, %v719
      %v748 = vmul.f32 %v638, %v720
      %v749 = vmul.f32 %v639, %v719
      %v750 = vmul.f32 %v640, %v720
      %v751 = vmul.f32 %v641, %v719
      %v752 = vmul.f32 %v642, %v720
      %753 = vset.pattern.permute.xlu0 1
      %754 = vperm.xlu0 %753, %v322
      %v755 = vpop.permute.xlu0 %754
      %757 = vset.pattern.permute.xlu0 1
      %758 = vperm.xlu0 %757, %v323
      %v759 = vpop.permute.xlu0 %758
      %761 = vset.pattern.permute.xlu0 1
      %762 = vperm.xlu0 %761, %v324
      %v763 = vpop.permute.xlu0 %762
      %765 = vset.pattern.permute.xlu0 1
      %766 = vperm.xlu0 %765, %v325
      %v767 = vpop.permute.xlu0 %766
      %769 = vset.pattern.permute.xlu0 1
      %770 = vperm.xlu0 %769, %v326
      %v771 = vpop.permute.xlu0 %770
      %773 = vset.pattern.permute.xlu0 1
      %774 = vperm.xlu0 %773, %v327
      %v775 = vpop.permute.xlu0 %774
      %777 = vset.pattern.permute.xlu0 1
      %778 = vperm.xlu0 %777, %v328
      %v779 = vpop.permute.xlu0 %778
      %781 = vset.pattern.permute.xlu0 1
      %782 = vperm.xlu0 %781, %v329
      %v783 = vpop.permute.xlu0 %782
      %785 = vset.pattern.permute.xlu0 1
      %786 = vperm.xlu0 %785, %v330
      %v787 = vpop.permute.xlu0 %786
      %789 = vset.pattern.permute.xlu0 1
      %790 = vperm.xlu0 %789, %v331
      %v791 = vpop.permute.xlu0 %790
      %793 = vset.pattern.permute.xlu0 1
      %794 = vperm.xlu0 %793, %v332
      %v795 = vpop.permute.xlu0 %794
      %797 = vset.pattern.permute.xlu0 1
      %798 = vperm.xlu0 %797, %v333
      %v799 = vpop.permute.xlu0 %798
      %801 = vset.pattern.permute.xlu0 1
      %802 = vperm.xlu0 %801, %v334
      %v803 = vpop.permute.xlu0 %802
      %805 = vset.pattern.permute.xlu0 1
      %806 = vperm.xlu0 %805, %v335
      %v807 = vpop.permute.xlu0 %806
      %809 = vset.pattern.permute.xlu0 1
      %810 = vperm.xlu0 %809, %v336
      %v811 = vpop.permute.xlu0 %810
      %813 = vset.pattern.permute.xlu0 1
      %814 = vperm.xlu0 %813, %v337
      %v815 = vpop.permute.xlu0 %814
      %v817 = vmul.f32 %v721, %v755
      %v818 = vmul.f32 %v722, %v755
      %v819 = vmul.f32 %v723, %v759
      %v820 = vmul.f32 %v724, %v759
      %v821 = vmul.f32 %v725, %v763
      %v822 = vmul.f32 %v726, %v763
      %v823 = vmul.f32 %v727, %v767
      %v824 = vmul.f32 %v728, %v767
      %v825 = vmul.f32 %v729, %v771
      %v826 = vmul.f32 %v730, %v771
      %v827 = vmul.f32 %v731, %v775
      %v828 = vmul.f32 %v732, %v775
      %v829 = vmul.f32 %v733, %v779
      %v830 = vmul.f32 %v734, %v779
      %v831 = vmul.f32 %v735, %v783
      %v832 = vmul.f32 %v736, %v783
      %v833 = vmul.f32 %v737, %v787
      %v834 = vmul.f32 %v738, %v787
      %v835 = vmul.f32 %v739, %v791
      %v836 = vmul.f32 %v740, %v791
      %v837 = vmul.f32 %v741, %v795
      %v838 = vmul.f32 %v742, %v795
      %v839 = vmul.f32 %v743, %v799
      %v840 = vmul.f32 %v744, %v799
      %v841 = vmul.f32 %v745, %v803
      %v842 = vmul.f32 %v746, %v803
      %v843 = vmul.f32 %v747, %v807
      %v844 = vmul.f32 %v748, %v807
      %v845 = vmul.f32 %v749, %v811
      %v846 = vmul.f32 %v750, %v811
      %v847 = vmul.f32 %v751, %v815
      %v848 = vmul.f32 %v752, %v815
      %849 = vst [vmem:[%s208] sm:$0xff] %v817
      %850 = vst [vmem:[%s208 + $0x8] sm:$0xff] %v818
      %851 = vst [vmem:[%s208 + $0x10] sm:$0xff] %v819
      %852 = vst [vmem:[%s208 + $0x18] sm:$0xff] %v820
      %853 = vst [vmem:[%s208 + $0x20] sm:$0xff] %v821
      %854 = vst [vmem:[%s208 + $0x28] sm:$0xff] %v822
      %855 = vst [vmem:[%s208 + $0x30] sm:$0xff] %v823
      %856 = vst [vmem:[%s208 + $0x38] sm:$0xff] %v824
      %857 = vst [vmem:[%s208 + $0x40] sm:$0xff] %v825
      %858 = vst [vmem:[%s208 + $0x48] sm:$0xff] %v826
      %859 = vst [vmem:[%s208 + $0x50] sm:$0xff] %v827
      %860 = vst [vmem:[%s208 + $0x58] sm:$0xff] %v828
      %861 = vst [vmem:[%s208 + $0x60] sm:$0xff] %v829
      %862 = vst [vmem:[%s208 + $0x68] sm:$0xff] %v830
      %863 = vst [vmem:[%s208 + $0x70] sm:$0xff] %v831
      %864 = vst [vmem:[%s208 + $0x78] sm:$0xff] %v832
      %865 = vst [vmem:[%s208 + $0x80] sm:$0xff] %v833
      %866 = vst [vmem:[%s208 + $0x88] sm:$0xff] %v834
      %867 = vst [vmem:[%s208 + $0x90] sm:$0xff] %v835
      %868 = vst [vmem:[%s208 + $0x98] sm:$0xff] %v836
      %869 = vst [vmem:[%s208 + $0xa0] sm:$0xff] %v837
      %870 = vst [vmem:[%s208 + $0xa8] sm:$0xff] %v838
      %871 = vst [vmem:[%s208 + $0xb0] sm:$0xff] %v839
      %872 = vst [vmem:[%s208 + $0xb8] sm:$0xff] %v840
      %873 = vst [vmem:[%s208 + $0xc0] sm:$0xff] %v841
      %874 = vst [vmem:[%s208 + $0xc8] sm:$0xff] %v842
      %875 = vst [vmem:[%s208 + $0xd0] sm:$0xff] %v843
      %876 = vst [vmem:[%s208 + $0xd8] sm:$0xff] %v844
      %877 = vst [vmem:[%s208 + $0xe0] sm:$0xff] %v845
      %878 = vst [vmem:[%s208 + $0xe8] sm:$0xff] %v846
      %879 = vst [vmem:[%s208 + $0xf0] sm:$0xff] %v847
      %880 = vst [vmem:[%s208 + $0xf8] sm:$0xff] %v848
      %s881 = smul.u32 2, %s19
      %p882 = scmp.lt.s32.totalorder %s18, 1
      %s883 = scalar_select %p882, %s18, 1
      %p884 = scmp.lt.s32.totalorder %s881, 1
      %s885 = scalar_select %p884, %s881, 1
      %s886 = smul.addr %s883, 32
      %s887 = sadd.s32 %s885, %s886
      %s888 = smul.addr %s887, 8
      %s889 = scalar_lea.vmem %s3, %s888
      // Predicated region
      $region33: #{seg_head.1} parent=31 // pred_check
        %p890 = pneg %p116
      $region34: #{seg_head.1} parent=31 // pred_check_branch
        %892 = sbr.rel (%p890) target = $region36
      $region35: #{seg_head.1} parent=31 // pred_region
        %s893 = smul.u32 2, %s19
      $region36: #{seg_head.1} parent=31 // pred_fallthru
        _
    $region32: #{seg_head.1} parent=5 // pred_fallthru
      _
    %p894 = scmp.le.s32.totalorder 2, %s9
    // Predicated region
    $region37: #{seg_head.1} parent=5 // pred_check
      %p895 = pneg %p894
    $region38: #{seg_head.1} parent=5 // pred_check_branch
      %897 = sbr.rel (%p895) target = $region40
    $region39: #{seg_head.1} parent=5 // pred_region
      %s898 = ssub.s32 %s9, 2
      // Predicated region
      $region41: #{seg_head.1} parent=39 // pred_check
        %p899 = pneg %p122
      $region42: #{seg_head.1} parent=39 // pred_check_branch
        %901 = sbr.rel (%p899) target = $region44
      $region43: #{seg_head.1} parent=39 // pred_region
        %s902 = smul.u32 2, %s21
        %p903 = scmp.lt.s32.totalorder %s20, 1
        %s904 = scalar_select %p903, %s20, 1
        %p905 = scmp.lt.s32.totalorder %s902, 1
        %s906 = scalar_select %p905, %s902, 1
        %s907 = smul.addr %s904, 32
        %s908 = sadd.s32 %s906, %s907
        %s909 = smul.addr %s908, 8
        %s910 = scalar_lea.vmem %s3, %s909
      $region44: #{seg_head.1} parent=39 // pred_fallthru
        _
    $region40: #{seg_head.1} parent=5 // pred_fallthru
      _
  $region6: #{seg_head.1} parent=0 // loop_footer
    %s13 = sadd.s32 1, %s9
  $region7: #{seg_head.1} parent=0 // loop_footer_branch
    %8 = sbr.rel target = $region3
  $region8: #{seg_head.1} parent=0 // loop_exit
    _

</llo_original>
